<compile_context>
chip_gen: v7x
topology: tpu7x:2x2x1
jax: 0.10.0
libtpu: 0.0.40
codegen_flags: <defaults>
</compile_context>

<pallas_src>
import functools

import jax
import jax.numpy as jnp
from jax.experimental import pallas as pl
from jax.experimental.pallas import tpu as pltpu

EPS = 1e-5


def _fused_kernel(x_ref, pk_ref, o_ref, xpad_ref, *, cin, h, w):
    """Fused 5x conv1x1 + 2x training-mode BN + relu + adds.

    x_ref    : (cin, h*w)          raw channel-major input (pixels on lanes)
    pk_ref   : (8, 3*cin + 4)      packed params:
               [w1^T | w2^T | w_fold^T | gamma1 | beta1 | gamma2 | beta2+b_fold]
    o_ref    : (8, (h+2)*(w+2))    channel-major output
    xpad_ref : (cin, (h+2)*(w+2))  VMEM scratch holding the zero-padded input
    """
    hp, wp = h + 2, w + 2
    n_pix = hp * wp
    inv_n = 1.0 / n_pix

    # ---- fused spatial zero-pad (the padding=1 of every 1x1 conv) -------------
    xpad_ref[...] = jnp.zeros_like(xpad_ref)
    for r in range(h):                       # 16 static lane-slice copies
        dst = (r + 1) * wp + 1
        xpad_ref[:, dst:dst + w] = x_ref[:, r * w:(r + 1) * w]
    xp = xpad_ref[...]                       # (cin, n_pix)

    # ---- packed per-channel params --------------------------------------------
    pk = pk_ref[...]
    w1t = pk[:, 0 * cin:1 * cin]             # (8, cin)  conv1 weights (out, in)
    w2t = pk[:, 1 * cin:2 * cin]             # (8, cin)  conv2 weights
    wft = pk[:, 2 * cin:3 * cin]             # (8, cin)  folded conv3/4/5 weights
    g1 = pk[:, 3 * cin + 0:3 * cin + 1]      # (8, 1)
    be1 = pk[:, 3 * cin + 1:3 * cin + 2]
    g2 = pk[:, 3 * cin + 2:3 * cin + 3]
    be2f = pk[:, 3 * cin + 3:3 * cin + 4]    # beta2 + folded v8 bias

    # ---- training-mode BN stats from input moments (centered, two-pass) -------
    # v - mean(v) = W (x_pad - m); conv bias cancels.  var_y[k] = w_k^T Cov w_k.
    m = jnp.sum(xp, axis=1, keepdims=True) * inv_n          # (cin, 1)
    xc = xp - m                                             # centered padded input
    cov = {}
    for c in range(cin):
        for d in range(c, cin):
            cov[(c, d)] = jnp.sum(xc[c:c + 1, :] * xc[d:d + 1, :],
                                  axis=1, keepdims=True) * inv_n   # (1, 1)

    def mean_of(wt):                                        # (8, 1) = wt @ m
        acc = None
        for c in range(cin):
            t = wt[:, c:c + 1] * m[c:c + 1, :]
            acc = t if acc is None else acc + t
        return acc

    def var_of(wt):                                         # (8, 1) = diag(wt C wt^T)
        acc = None
        for c in range(cin):
            for d in range(cin):
                cc = cov[(min(c, d), max(c, d))]
                t = wt[:, c:c + 1] * wt[:, d:d + 1] * cc
                acc = t if acc is None else acc + t
        return acc

    sc1 = g1 * jax.lax.rsqrt(var_of(w1t) + EPS)             # (8, 1)
    sc2 = g2 * jax.lax.rsqrt(var_of(w2t) + EPS)
    sh1 = be1 - mean_of(w1t) * sc1                          # (8, 1)
    sh2 = be2f - mean_of(w2t) * sc2                         # includes folded v8 bias

    # ---- fold BN scales into weights; K=cin contraction as VPU broadcast-FMAs -
    a1 = w1t * sc1                                          # relu branch
    a2 = w2t * sc2 + wft                                    # bn2 branch + v8 branch
    y1 = None
    y2 = None
    for c in range(cin):
        xrow = xp[c:c + 1, :]                               # (1, n_pix)
        t1 = a1[:, c:c + 1] * xrow                          # (8, n_pix)
        t2 = a2[:, c:c + 1] * xrow
        y1 = t1 if y1 is None else y1 + t1
        y2 = t2 if y2 is None else y2 + t2

    o_ref[...] = jnp.maximum(y1 + sh1, 0.0) + y2 + sh2      # v3 + v5 + v8


@jax.jit
def model_forward(x_nchw, params):
    """x_nchw: (1, 3, H, W) float32.  Returns (1, 8, H+2, W+2) float32."""
    N, Cin, H, W = x_nchw.shape
    assert N == 1, "channel-major pixel-on-lanes layout relies on batch 1"
    Hp, Wp = H + 2, W + 2
    Cout = 8

    (w1, b1), (w2, b2), (w3, b3), (w4, b4), (w5, b5), (g1, be1), (g2, be2) = params

    # Trace-time algebra: fold conv3/conv4/conv5 into one 3->8 weight; b1/b2 are
    # dropped (cancelled by training-mode BN mean subtraction); the folded v8
    # bias merges into beta2 so only one shift per branch remains.
    hi = jax.lax.Precision.HIGHEST
    w_fold = jnp.dot(w3 + w4, w5, precision=hi)             # (3, 8)
    b_fold = jnp.dot(b3 + b4, w5, precision=hi) + b5        # (8,)

    packed = jnp.concatenate(
        [w1.T, w2.T, w_fold.T,
         g1[:, None], be1[:, None], g2[:, None], (be2 + b_fold)[:, None]],
        axis=1)                                             # (8, 3*Cin + 4)

    x_cm = x_nchw.reshape(Cin, H * W)                       # free metadata reshape

    vmem = pl.BlockSpec(memory_space=pltpu.MemorySpace.VMEM)
    out = pl.pallas_call(
        functools.partial(_fused_kernel, cin=Cin, h=H, w=W),
        out_shape=jax.ShapeDtypeStruct((Cout, Hp * Wp), jnp.float32),
        in_specs=[vmem, vmem],
        out_specs=vmem,
        scratch_shapes=[pltpu.VMEM((Cin, Hp * Wp), jnp.float32)],
    )(x_cm, packed)

    return out.reshape(N, Cout, Hp, Wp)                     # free metadata reshape


def init_params(key):
    """Deterministic parameter init mirroring the PyTorch module shapes."""
    ks = jax.random.split(key, 10)

    def conv_init(kw, kb, cin, cout):
        bound = 1.0 / jnp.sqrt(jnp.float32(cin))            # 1x1-conv kaiming bound
        w = jax.random.uniform(kw, (cin, cout), jnp.float32, -bound, bound)
        b = jax.random.uniform(kb, (cout,), jnp.float32, -bound, bound)
        return w, b

    p_conv1 = conv_init(ks[0], ks[1], 3, 8)
    p_conv2 = conv_init(ks[2], ks[3], 3, 8)
    p_conv3 = conv_init(ks[4], ks[5], 3, 8)
    p_conv4 = conv_init(ks[6], ks[7], 3, 8)
    p_conv5 = conv_init(ks[8], ks[9], 8, 8)   # TODO(synk): adjusted conv5 (see header)

    g1 = jnp.ones((8,), jnp.float32)
    be1 = jnp.zeros((8,), jnp.float32)
    g2 = jnp.ones((8,), jnp.float32)
    be2 = jnp.zeros((8,), jnp.float32)

    return (p_conv1, p_conv2, p_conv3, p_conv4, p_conv5, (g1, be1), (g2, be2))


def reference_forward(x_nchw, params):
    """Pure-JAX reference mirroring the (shape-fixed) PyTorch module, un-fused."""
    N, Cin, H, W = x_nchw.shape
    Hp, Wp = H + 2, W + 2
    xpad = jnp.pad(x_nchw, ((0, 0), (0, 0), (1, 1), (1, 1)))
    xm = jnp.transpose(xpad, (0, 2, 3, 1)).reshape(N * Hp * Wp, Cin)

    (w1, b1), (w2, b2), (w3, b3), (w4, b4), (w5, b5), (g1, be1), (g2, be2) = params

    def conv(inp, w, b):
        return inp @ w + b

    def bn(v, g, b):
        mu = jnp.mean(v, axis=0, keepdims=True)
        var = jnp.mean((v - mu) ** 2, axis=0, keepdims=True)
        return (v - mu) / jnp.sqrt(var + EPS) * g + b

    v3 = jnp.maximum(bn(conv(xm, w1, b1), g1, be1), 0.0)
    v5 = bn(conv(xm, w2, b2), g2, be2)
    v8 = conv(conv(xm, w3, b3) + conv(xm, w4, b4), w5, b5)
    v9 = v3 + v5 + v8
    return jnp.transpose(v9.reshape(N, Hp, Wp, 8), (0, 3, 1, 2))


if __name__ == "__main__":
    key = jax.random.PRNGKey(0)
    k_x, k_p = jax.random.split(key)

    x1 = jax.random.normal(k_x, (1, 3, 16, 16), jnp.float32)  # torch.randn(1,3,16,16)
    params = init_params(k_p)

    out = jax.block_until_ready(model_forward(x1, params))

    ref = reference_forward(x1, params)
    assert out.shape == (1, 8, 18, 18), out.shape
    assert jnp.allclose(out, ref, atol=1e-4, rtol=1e-4), "mismatch vs pure-JAX reference"

    print("KERNEL_OK")
</pallas_src>

<mosaic_0001>
module attributes {stable_mosaic.version = 11 : i64} {
  func.func @_fused_kernel(%arg0: memref<3x256xf32, #tpu.memory_space<vmem>>, %arg1: memref<8x13xf32, #tpu.memory_space<vmem>>, %arg2: memref<8x324xf32, #tpu.memory_space<vmem>>, %arg3: memref<3x324xf32, #tpu.memory_space<vmem>>) attributes {dimension_semantics = [], scalar_prefetch = 0 : i64, scratch_operands = 1 : i64, tpu.core_type = #tpu.core_type<tc>} {
    %cst = arith.constant 0.000000e+00 : f32
    %0 = vector.broadcast %cst : f32 to vector<3x324xf32>
    %c0 = arith.constant 0 : index
    %c0_0 = arith.constant 0 : index
    %1 = vector.load %arg3[%c0, %c0_0] : memref<3x324xf32, #tpu.memory_space<vmem>>, vector<3x324xf32>
    tpu.vector_store %arg3[%c0, %c0_0], %0 {strides = array<i32>} : memref<3x324xf32, #tpu.memory_space<vmem>>, vector<3x324xf32>,
    %c0_1 = arith.constant 0 : index
    %c0_2 = arith.constant 0 : index
    %2 = vector.load %arg0[%c0_1, %c0_2] : memref<3x256xf32, #tpu.memory_space<vmem>>, vector<3x16xf32>
    %c0_3 = arith.constant 0 : index
    %c19 = arith.constant 19 : index
    %3 = vector.load %arg3[%c0_3, %c19] : memref<3x324xf32, #tpu.memory_space<vmem>>, vector<3x16xf32>
    tpu.vector_store %arg3[%c0_3, %c19], %2 {strides = array<i32>} : memref<3x324xf32, #tpu.memory_space<vmem>>, vector<3x16xf32>,
    %c0_4 = arith.constant 0 : index
    %c16 = arith.constant 16 : index
    %4 = vector.load %arg0[%c0_4, %c16] : memref<3x256xf32, #tpu.memory_space<vmem>>, vector<3x16xf32>
    %c0_5 = arith.constant 0 : index
    %c37 = arith.constant 37 : index
    %5 = vector.load %arg3[%c0_5, %c37] : memref<3x324xf32, #tpu.memory_space<vmem>>, vector<3x16xf32>
    tpu.vector_store %arg3[%c0_5, %c37], %4 {strides = array<i32>} : memref<3x324xf32, #tpu.memory_space<vmem>>, vector<3x16xf32>,
    %c0_6 = arith.constant 0 : index
    %c32 = arith.constant 32 : index
    %6 = vector.load %arg0[%c0_6, %c32] : memref<3x256xf32, #tpu.memory_space<vmem>>, vector<3x16xf32>
    %c0_7 = arith.constant 0 : index
    %c55 = arith.constant 55 : index
    %7 = vector.load %arg3[%c0_7, %c55] : memref<3x324xf32, #tpu.memory_space<vmem>>, vector<3x16xf32>
    tpu.vector_store %arg3[%c0_7, %c55], %6 {strides = array<i32>} : memref<3x324xf32, #tpu.memory_space<vmem>>, vector<3x16xf32>,
    %c0_8 = arith.constant 0 : index
    %c48 = arith.constant 48 : index
    %8 = vector.load %arg0[%c0_8, %c48] : memref<3x256xf32, #tpu.memory_space<vmem>>, vector<3x16xf32>
    %c0_9 = arith.constant 0 : index
    %c73 = arith.constant 73 : index
    %9 = vector.load %arg3[%c0_9, %c73] : memref<3x324xf32, #tpu.memory_space<vmem>>, vector<3x16xf32>
    tpu.vector_store %arg3[%c0_9, %c73], %8 {strides = array<i32>} : memref<3x324xf32, #tpu.memory_space<vmem>>, vector<3x16xf32>,
    %c0_10 = arith.constant 0 : index
    %c64 = arith.constant 64 : index
    %10 = vector.load %arg0[%c0_10, %c64] : memref<3x256xf32, #tpu.memory_space<vmem>>, vector<3x16xf32>
    %c0_11 = arith.constant 0 : index
    %c91 = arith.constant 91 : index
    %11 = vector.load %arg3[%c0_11, %c91] : memref<3x324xf32, #tpu.memory_space<vmem>>, vector<3x16xf32>
    tpu.vector_store %arg3[%c0_11, %c91], %10 {strides = array<i32>} : memref<3x324xf32, #tpu.memory_space<vmem>>, vector<3x16xf32>,
    %c0_12 = arith.constant 0 : index
    %c80 = arith.constant 80 : index
    %12 = vector.load %arg0[%c0_12, %c80] : memref<3x256xf32, #tpu.memory_space<vmem>>, vector<3x16xf32>
    %c0_13 = arith.constant 0 : index
    %c109 = arith.constant 109 : index
    %13 = vector.load %arg3[%c0_13, %c109] : memref<3x324xf32, #tpu.memory_space<vmem>>, vector<3x16xf32>
    tpu.vector_store %arg3[%c0_13, %c109], %12 {strides = array<i32>} : memref<3x324xf32, #tpu.memory_space<vmem>>, vector<3x16xf32>,
    %c0_14 = arith.constant 0 : index
    %c96 = arith.constant 96 : index
    %14 = vector.load %arg0[%c0_14, %c96] : memref<3x256xf32, #tpu.memory_space<vmem>>, vector<3x16xf32>
    %c0_15 = arith.constant 0 : index
    %c127 = arith.constant 127 : index
    %15 = vector.load %arg3[%c0_15, %c127] : memref<3x324xf32, #tpu.memory_space<vmem>>, vector<3x16xf32>
    tpu.vector_store %arg3[%c0_15, %c127], %14 {strides = array<i32>} : memref<3x324xf32, #tpu.memory_space<vmem>>, vector<3x16xf32>,
    %c0_16 = arith.constant 0 : index
    %c112 = arith.constant 112 : index
    %16 = vector.load %arg0[%c0_16, %c112] : memref<3x256xf32, #tpu.memory_space<vmem>>, vector<3x16xf32>
    %c0_17 = arith.constant 0 : index
    %c145 = arith.constant 145 : index
    %17 = vector.load %arg3[%c0_17, %c145] : memref<3x324xf32, #tpu.memory_space<vmem>>, vector<3x16xf32>
    tpu.vector_store %arg3[%c0_17, %c145], %16 {strides = array<i32>} : memref<3x324xf32, #tpu.memory_space<vmem>>, vector<3x16xf32>,
    %c0_18 = arith.constant 0 : index
    %c128 = arith.constant 128 : index
    %18 = vector.load %arg0[%c0_18, %c128] : memref<3x256xf32, #tpu.memory_space<vmem>>, vector<3x16xf32>
    %c0_19 = arith.constant 0 : index
    %c163 = arith.constant 163 : index
    %19 = vector.load %arg3[%c0_19, %c163] : memref<3x324xf32, #tpu.memory_space<vmem>>, vector<3x16xf32>
    tpu.vector_store %arg3[%c0_19, %c163], %18 {strides = array<i32>} : memref<3x324xf32, #tpu.memory_space<vmem>>, vector<3x16xf32>,
    %c0_20 = arith.constant 0 : index
    %c144 = arith.constant 144 : index
    %20 = vector.load %arg0[%c0_20, %c144] : memref<3x256xf32, #tpu.memory_space<vmem>>, vector<3x16xf32>
    %c0_21 = arith.constant 0 : index
    %c181 = arith.constant 181 : index
    %21 = vector.load %arg3[%c0_21, %c181] : memref<3x324xf32, #tpu.memory_space<vmem>>, vector<3x16xf32>
    tpu.vector_store %arg3[%c0_21, %c181], %20 {strides = array<i32>} : memref<3x324xf32, #tpu.memory_space<vmem>>, vector<3x16xf32>,
    %c0_22 = arith.constant 0 : index
    %c160 = arith.constant 160 : index
    %22 = vector.load %arg0[%c0_22, %c160] : memref<3x256xf32, #tpu.memory_space<vmem>>, vector<3x16xf32>
    %c0_23 = arith.constant 0 : index
    %c199 = arith.constant 199 : index
    %23 = vector.load %arg3[%c0_23, %c199] : memref<3x324xf32, #tpu.memory_space<vmem>>, vector<3x16xf32>
    tpu.vector_store %arg3[%c0_23, %c199], %22 {strides = array<i32>} : memref<3x324xf32, #tpu.memory_space<vmem>>, vector<3x16xf32>,
    %c0_24 = arith.constant 0 : index
    %c176 = arith.constant 176 : index
    %24 = vector.load %arg0[%c0_24, %c176] : memref<3x256xf32, #tpu.memory_space<vmem>>, vector<3x16xf32>
    %c0_25 = arith.constant 0 : index
    %c217 = arith.constant 217 : index
    %25 = vector.load %arg3[%c0_25, %c217] : memref<3x324xf32, #tpu.memory_space<vmem>>, vector<3x16xf32>
    tpu.vector_store %arg3[%c0_25, %c217], %24 {strides = array<i32>} : memref<3x324xf32, #tpu.memory_space<vmem>>, vector<3x16xf32>,
    %c0_26 = arith.constant 0 : index
    %c192 = arith.constant 192 : index
    %26 = vector.load %arg0[%c0_26, %c192] : memref<3x256xf32, #tpu.memory_space<vmem>>, vector<3x16xf32>
    %c0_27 = arith.constant 0 : index
    %c235 = arith.constant 235 : index
    %27 = vector.load %arg3[%c0_27, %c235] : memref<3x324xf32, #tpu.memory_space<vmem>>, vector<3x16xf32>
    tpu.vector_store %arg3[%c0_27, %c235], %26 {strides = array<i32>} : memref<3x324xf32, #tpu.memory_space<vmem>>, vector<3x16xf32>,
    %c0_28 = arith.constant 0 : index
    %c208 = arith.constant 208 : index
    %28 = vector.load %arg0[%c0_28, %c208] : memref<3x256xf32, #tpu.memory_space<vmem>>, vector<3x16xf32>
    %c0_29 = arith.constant 0 : index
    %c253 = arith.constant 253 : index
    %29 = vector.load %arg3[%c0_29, %c253] : memref<3x324xf32, #tpu.memory_space<vmem>>, vector<3x16xf32>
    tpu.vector_store %arg3[%c0_29, %c253], %28 {strides = array<i32>} : memref<3x324xf32, #tpu.memory_space<vmem>>, vector<3x16xf32>,
    %c0_30 = arith.constant 0 : index
    %c224 = arith.constant 224 : index
    %30 = vector.load %arg0[%c0_30, %c224] : memref<3x256xf32, #tpu.memory_space<vmem>>, vector<3x16xf32>
    %c0_31 = arith.constant 0 : index
    %c271 = arith.constant 271 : index
    %31 = vector.load %arg3[%c0_31, %c271] : memref<3x324xf32, #tpu.memory_space<vmem>>, vector<3x16xf32>
    tpu.vector_store %arg3[%c0_31, %c271], %30 {strides = array<i32>} : memref<3x324xf32, #tpu.memory_space<vmem>>, vector<3x16xf32>,
    %c0_32 = arith.constant 0 : index
    %c240 = arith.constant 240 : index
    %32 = vector.load %arg0[%c0_32, %c240] : memref<3x256xf32, #tpu.memory_space<vmem>>, vector<3x16xf32>
    %c0_33 = arith.constant 0 : index
    %c289 = arith.constant 289 : index
    %33 = vector.load %arg3[%c0_33, %c289] : memref<3x324xf32, #tpu.memory_space<vmem>>, vector<3x16xf32>
    tpu.vector_store %arg3[%c0_33, %c289], %32 {strides = array<i32>} : memref<3x324xf32, #tpu.memory_space<vmem>>, vector<3x16xf32>,
    %c0_34 = arith.constant 0 : index
    %c0_35 = arith.constant 0 : index
    %34 = vector.load %arg3[%c0_34, %c0_35] : memref<3x324xf32, #tpu.memory_space<vmem>>, vector<3x324xf32>
    %c0_36 = arith.constant 0 : index
    %c0_37 = arith.constant 0 : index
    %35 = vector.load %arg1[%c0_36, %c0_37] : memref<8x13xf32, #tpu.memory_space<vmem>>, vector<8x13xf32>
    %36 = vector.extract_strided_slice %35 {offsets = [0, 0], sizes = [8, 3], strides = [1, 1]} : vector<8x13xf32> to vector<8x3xf32>
    %37 = vector.extract_strided_slice %35 {offsets = [0, 3], sizes = [8, 3], strides = [1, 1]} : vector<8x13xf32> to vector<8x3xf32>
    %38 = vector.extract_strided_slice %35 {offsets = [0, 6], sizes = [8, 3], strides = [1, 1]} : vector<8x13xf32> to vector<8x3xf32>
    %39 = vector.extract_strided_slice %35 {offsets = [0, 9], sizes = [8, 1], strides = [1, 1]} : vector<8x13xf32> to vector<8x1xf32>
    %40 = vector.extract_strided_slice %35 {offsets = [0, 10], sizes = [8, 1], strides = [1, 1]} : vector<8x13xf32> to vector<8x1xf32>
    %41 = vector.extract_strided_slice %35 {offsets = [0, 11], sizes = [8, 1], strides = [1, 1]} : vector<8x13xf32> to vector<8x1xf32>
    %42 = vector.extract_strided_slice %35 {offsets = [0, 12], sizes = [8, 1], strides = [1, 1]} : vector<8x13xf32> to vector<8x1xf32>
    %cst_38 = arith.constant dense<0.000000e+00> : vector<3xf32>
    %43 = vector.multi_reduction <add>, %34, %cst_38 [1] : vector<3x324xf32> to vector<3xf32>
    %44 = vector.shape_cast %43 : vector<3xf32> to vector<3x1xf32>
    %cst_39 = arith.constant 0.00308641978 : f32
    %45 = vector.broadcast %cst_39 : f32 to vector<3x1xf32>
    %46 = arith.mulf %44, %45 : vector<3x1xf32>
    %47 = vector.broadcast %46 : vector<3x1xf32> to vector<3x324xf32>
    %48 = arith.subf %34, %47 : vector<3x324xf32>
    %49 = vector.extract_strided_slice %48 {offsets = [0, 0], sizes = [1, 324], strides = [1, 1]} : vector<3x324xf32> to vector<1x324xf32>
    %50 = vector.extract_strided_slice %48 {offsets = [0, 0], sizes = [1, 324], strides = [1, 1]} : vector<3x324xf32> to vector<1x324xf32>
    %51 = arith.mulf %49, %50 : vector<1x324xf32>
    %cst_40 = arith.constant dense<0.000000e+00> : vector<1xf32>
    %52 = vector.multi_reduction <add>, %51, %cst_40 [1] : vector<1x324xf32> to vector<1xf32>
    %53 = vector.shape_cast %52 : vector<1xf32> to vector<1x1xf32>
    %cst_41 = arith.constant 0.00308641978 : f32
    %54 = vector.broadcast %cst_41 : f32 to vector<1x1xf32>
    %55 = arith.mulf %53, %54 : vector<1x1xf32>
    %56 = vector.extract_strided_slice %48 {offsets = [0, 0], sizes = [1, 324], strides = [1, 1]} : vector<3x324xf32> to vector<1x324xf32>
    %57 = vector.extract_strided_slice %48 {offsets = [1, 0], sizes = [1, 324], strides = [1, 1]} : vector<3x324xf32> to vector<1x324xf32>
    %58 = arith.mulf %56, %57 : vector<1x324xf32>
    %cst_42 = arith.constant dense<0.000000e+00> : vector<1xf32>
    %59 = vector.multi_reduction <add>, %58, %cst_42 [1] : vector<1x324xf32> to vector<1xf32>
    %60 = vector.shape_cast %59 : vector<1xf32> to vector<1x1xf32>
    %cst_43 = arith.constant 0.00308641978 : f32
    %61 = vector.broadcast %cst_43 : f32 to vector<1x1xf32>
    %62 = arith.mulf %60, %61 : vector<1x1xf32>
    %63 = vector.extract_strided_slice %48 {offsets = [0, 0], sizes = [1, 324], strides = [1, 1]} : vector<3x324xf32> to vector<1x324xf32>
    %64 = vector.extract_strided_slice %48 {offsets = [2, 0], sizes = [1, 324], strides = [1, 1]} : vector<3x324xf32> to vector<1x324xf32>
    %65 = arith.mulf %63, %64 : vector<1x324xf32>
    %cst_44 = arith.constant dense<0.000000e+00> : vector<1xf32>
    %66 = vector.multi_reduction <add>, %65, %cst_44 [1] : vector<1x324xf32> to vector<1xf32>
    %67 = vector.shape_cast %66 : vector<1xf32> to vector<1x1xf32>
    %cst_45 = arith.constant 0.00308641978 : f32
    %68 = vector.broadcast %cst_45 : f32 to vector<1x1xf32>
    %69 = arith.mulf %67, %68 : vector<1x1xf32>
    %70 = vector.extract_strided_slice %48 {offsets = [1, 0], sizes = [1, 324], strides = [1, 1]} : vector<3x324xf32> to vector<1x324xf32>
    %71 = vector.extract_strided_slice %48 {offsets = [1, 0], sizes = [1, 324], strides = [1, 1]} : vector<3x324xf32> to vector<1x324xf32>
    %72 = arith.mulf %70, %71 : vector<1x324xf32>
    %cst_46 = arith.constant dense<0.000000e+00> : vector<1xf32>
    %73 = vector.multi_reduction <add>, %72, %cst_46 [1] : vector<1x324xf32> to vector<1xf32>
    %74 = vector.shape_cast %73 : vector<1xf32> to vector<1x1xf32>
    %cst_47 = arith.constant 0.00308641978 : f32
    %75 = vector.broadcast %cst_47 : f32 to vector<1x1xf32>
    %76 = arith.mulf %74, %75 : vector<1x1xf32>
    %77 = vector.extract_strided_slice %48 {offsets = [1, 0], sizes = [1, 324], strides = [1, 1]} : vector<3x324xf32> to vector<1x324xf32>
    %78 = vector.extract_strided_slice %48 {offsets = [2, 0], sizes = [1, 324], strides = [1, 1]} : vector<3x324xf32> to vector<1x324xf32>
    %79 = arith.mulf %77, %78 : vector<1x324xf32>
    %cst_48 = arith.constant dense<0.000000e+00> : vector<1xf32>
    %80 = vector.multi_reduction <add>, %79, %cst_48 [1] : vector<1x324xf32> to vector<1xf32>
    %81 = vector.shape_cast %80 : vector<1xf32> to vector<1x1xf32>
    %cst_49 = arith.constant 0.00308641978 : f32
    %82 = vector.broadcast %cst_49 : f32 to vector<1x1xf32>
    %83 = arith.mulf %81, %82 : vector<1x1xf32>
    %84 = vector.extract_strided_slice %48 {offsets = [2, 0], sizes = [1, 324], strides = [1, 1]} : vector<3x324xf32> to vector<1x324xf32>
    %85 = vector.extract_strided_slice %48 {offsets = [2, 0], sizes = [1, 324], strides = [1, 1]} : vector<3x324xf32> to vector<1x324xf32>
    %86 = arith.mulf %84, %85 : vector<1x324xf32>
    %cst_50 = arith.constant dense<0.000000e+00> : vector<1xf32>
    %87 = vector.multi_reduction <add>, %86, %cst_50 [1] : vector<1x324xf32> to vector<1xf32>
    %88 = vector.shape_cast %87 : vector<1xf32> to vector<1x1xf32>
    %cst_51 = arith.constant 0.00308641978 : f32
    %89 = vector.broadcast %cst_51 : f32 to vector<1x1xf32>
    %90 = arith.mulf %88, %89 : vector<1x1xf32>
    %91 = vector.extract_strided_slice %36 {offsets = [0, 0], sizes = [8, 1], strides = [1, 1]} : vector<8x3xf32> to vector<8x1xf32>
    %92 = vector.extract_strided_slice %36 {offsets = [0, 0], sizes = [8, 1], strides = [1, 1]} : vector<8x3xf32> to vector<8x1xf32>
    %93 = arith.mulf %91, %92 : vector<8x1xf32>
    %94 = vector.broadcast %55 : vector<1x1xf32> to vector<8x1xf32>
    %95 = arith.mulf %93, %94 : vector<8x1xf32>
    %96 = vector.extract_strided_slice %36 {offsets = [0, 0], sizes = [8, 1], strides = [1, 1]} : vector<8x3xf32> to vector<8x1xf32>
    %97 = vector.extract_strided_slice %36 {offsets = [0, 1], sizes = [8, 1], strides = [1, 1]} : vector<8x3xf32> to vector<8x1xf32>
    %98 = arith.mulf %96, %97 : vector<8x1xf32>
    %99 = vector.broadcast %62 : vector<1x1xf32> to vector<8x1xf32>
    %100 = arith.mulf %98, %99 : vector<8x1xf32>
    %101 = arith.addf %95, %100 : vector<8x1xf32>
    %102 = vector.extract_strided_slice %36 {offsets = [0, 0], sizes = [8, 1], strides = [1, 1]} : vector<8x3xf32> to vector<8x1xf32>
    %103 = vector.extract_strided_slice %36 {offsets = [0, 2], sizes = [8, 1], strides = [1, 1]} : vector<8x3xf32> to vector<8x1xf32>
    %104 = arith.mulf %102, %103 : vector<8x1xf32>
    %105 = vector.broadcast %69 : vector<1x1xf32> to vector<8x1xf32>
    %106 = arith.mulf %104, %105 : vector<8x1xf32>
    %107 = arith.addf %101, %106 : vector<8x1xf32>
    %108 = vector.extract_strided_slice %36 {offsets = [0, 1], sizes = [8, 1], strides = [1, 1]} : vector<8x3xf32> to vector<8x1xf32>
    %109 = vector.extract_strided_slice %36 {offsets = [0, 0], sizes = [8, 1], strides = [1, 1]} : vector<8x3xf32> to vector<8x1xf32>
    %110 = arith.mulf %108, %109 : vector<8x1xf32>
    %111 = vector.broadcast %62 : vector<1x1xf32> to vector<8x1xf32>
    %112 = arith.mulf %110, %111 : vector<8x1xf32>
    %113 = arith.addf %107, %112 : vector<8x1xf32>
    %114 = vector.extract_strided_slice %36 {offsets = [0, 1], sizes = [8, 1], strides = [1, 1]} : vector<8x3xf32> to vector<8x1xf32>
    %115 = vector.extract_strided_slice %36 {offsets = [0, 1], sizes = [8, 1], strides = [1, 1]} : vector<8x3xf32> to vector<8x1xf32>
    %116 = arith.mulf %114, %115 : vector<8x1xf32>
    %117 = vector.broadcast %76 : vector<1x1xf32> to vector<8x1xf32>
    %118 = arith.mulf %116, %117 : vector<8x1xf32>
    %119 = arith.addf %113, %118 : vector<8x1xf32>
    %120 = vector.extract_strided_slice %36 {offsets = [0, 1], sizes = [8, 1], strides = [1, 1]} : vector<8x3xf32> to vector<8x1xf32>
    %121 = vector.extract_strided_slice %36 {offsets = [0, 2], sizes = [8, 1], strides = [1, 1]} : vector<8x3xf32> to vector<8x1xf32>
    %122 = arith.mulf %120, %121 : vector<8x1xf32>
    %123 = vector.broadcast %83 : vector<1x1xf32> to vector<8x1xf32>
    %124 = arith.mulf %122, %123 : vector<8x1xf32>
    %125 = arith.addf %119, %124 : vector<8x1xf32>
    %126 = vector.extract_strided_slice %36 {offsets = [0, 2], sizes = [8, 1], strides = [1, 1]} : vector<8x3xf32> to vector<8x1xf32>
    %127 = vector.extract_strided_slice %36 {offsets = [0, 0], sizes = [8, 1], strides = [1, 1]} : vector<8x3xf32> to vector<8x1xf32>
    %128 = arith.mulf %126, %127 : vector<8x1xf32>
    %129 = vector.broadcast %69 : vector<1x1xf32> to vector<8x1xf32>
    %130 = arith.mulf %128, %129 : vector<8x1xf32>
    %131 = arith.addf %125, %130 : vector<8x1xf32>
    %132 = vector.extract_strided_slice %36 {offsets = [0, 2], sizes = [8, 1], strides = [1, 1]} : vector<8x3xf32> to vector<8x1xf32>
    %133 = vector.extract_strided_slice %36 {offsets = [0, 1], sizes = [8, 1], strides = [1, 1]} : vector<8x3xf32> to vector<8x1xf32>
    %134 = arith.mulf %132, %133 : vector<8x1xf32>
    %135 = vector.broadcast %83 : vector<1x1xf32> to vector<8x1xf32>
    %136 = arith.mulf %134, %135 : vector<8x1xf32>
    %137 = arith.addf %131, %136 : vector<8x1xf32>
    %138 = vector.extract_strided_slice %36 {offsets = [0, 2], sizes = [8, 1], strides = [1, 1]} : vector<8x3xf32> to vector<8x1xf32>
    %139 = vector.extract_strided_slice %36 {offsets = [0, 2], sizes = [8, 1], strides = [1, 1]} : vector<8x3xf32> to vector<8x1xf32>
    %140 = arith.mulf %138, %139 : vector<8x1xf32>
    %141 = vector.broadcast %90 : vector<1x1xf32> to vector<8x1xf32>
    %142 = arith.mulf %140, %141 : vector<8x1xf32>
    %143 = arith.addf %137, %142 : vector<8x1xf32>
    %cst_52 = arith.constant 9.99999974E-6 : f32
    %144 = vector.broadcast %cst_52 : f32 to vector<8x1xf32>
    %145 = arith.addf %143, %144 : vector<8x1xf32>
    %146 = math.rsqrt %145 : vector<8x1xf32>
    %147 = arith.mulf %39, %146 : vector<8x1xf32>
    %148 = vector.extract_strided_slice %37 {offsets = [0, 0], sizes = [8, 1], strides = [1, 1]} : vector<8x3xf32> to vector<8x1xf32>
    %149 = vector.extract_strided_slice %37 {offsets = [0, 0], sizes = [8, 1], strides = [1, 1]} : vector<8x3xf32> to vector<8x1xf32>
    %150 = arith.mulf %148, %149 : vector<8x1xf32>
    %151 = vector.broadcast %55 : vector<1x1xf32> to vector<8x1xf32>
    %152 = arith.mulf %150, %151 : vector<8x1xf32>
    %153 = vector.extract_strided_slice %37 {offsets = [0, 0], sizes = [8, 1], strides = [1, 1]} : vector<8x3xf32> to vector<8x1xf32>
    %154 = vector.extract_strided_slice %37 {offsets = [0, 1], sizes = [8, 1], strides = [1, 1]} : vector<8x3xf32> to vector<8x1xf32>
    %155 = arith.mulf %153, %154 : vector<8x1xf32>
    %156 = vector.broadcast %62 : vector<1x1xf32> to vector<8x1xf32>
    %157 = arith.mulf %155, %156 : vector<8x1xf32>
    %158 = arith.addf %152, %157 : vector<8x1xf32>
    %159 = vector.extract_strided_slice %37 {offsets = [0, 0], sizes = [8, 1], strides = [1, 1]} : vector<8x3xf32> to vector<8x1xf32>
    %160 = vector.extract_strided_slice %37 {offsets = [0, 2], sizes = [8, 1], strides = [1, 1]} : vector<8x3xf32> to vector<8x1xf32>
    %161 = arith.mulf %159, %160 : vector<8x1xf32>
    %162 = vector.broadcast %69 : vector<1x1xf32> to vector<8x1xf32>
    %163 = arith.mulf %161, %162 : vector<8x1xf32>
    %164 = arith.addf %158, %163 : vector<8x1xf32>
    %165 = vector.extract_strided_slice %37 {offsets = [0, 1], sizes = [8, 1], strides = [1, 1]} : vector<8x3xf32> to vector<8x1xf32>
    %166 = vector.extract_strided_slice %37 {offsets = [0, 0], sizes = [8, 1], strides = [1, 1]} : vector<8x3xf32> to vector<8x1xf32>
    %167 = arith.mulf %165, %166 : vector<8x1xf32>
    %168 = vector.broadcast %62 : vector<1x1xf32> to vector<8x1xf32>
    %169 = arith.mulf %167, %168 : vector<8x1xf32>
    %170 = arith.addf %164, %169 : vector<8x1xf32>
    %171 = vector.extract_strided_slice %37 {offsets = [0, 1], sizes = [8, 1], strides = [1, 1]} : vector<8x3xf32> to vector<8x1xf32>
    %172 = vector.extract_strided_slice %37 {offsets = [0, 1], sizes = [8, 1], strides = [1, 1]} : vector<8x3xf32> to vector<8x1xf32>
    %173 = arith.mulf %171, %172 : vector<8x1xf32>
    %174 = vector.broadcast %76 : vector<1x1xf32> to vector<8x1xf32>
    %175 = arith.mulf %173, %174 : vector<8x1xf32>
    %176 = arith.addf %170, %175 : vector<8x1xf32>
    %177 = vector.extract_strided_slice %37 {offsets = [0, 1], sizes = [8, 1], strides = [1, 1]} : vector<8x3xf32> to vector<8x1xf32>
    %178 = vector.extract_strided_slice %37 {offsets = [0, 2], sizes = [8, 1], strides = [1, 1]} : vector<8x3xf32> to vector<8x1xf32>
    %179 = arith.mulf %177, %178 : vector<8x1xf32>
    %180 = vector.broadcast %83 : vector<1x1xf32> to vector<8x1xf32>
    %181 = arith.mulf %179, %180 : vector<8x1xf32>
    %182 = arith.addf %176, %181 : vector<8x1xf32>
    %183 = vector.extract_strided_slice %37 {offsets = [0, 2], sizes = [8, 1], strides = [1, 1]} : vector<8x3xf32> to vector<8x1xf32>
    %184 = vector.extract_strided_slice %37 {offsets = [0, 0], sizes = [8, 1], strides = [1, 1]} : vector<8x3xf32> to vector<8x1xf32>
    %185 = arith.mulf %183, %184 : vector<8x1xf32>
    %186 = vector.broadcast %69 : vector<1x1xf32> to vector<8x1xf32>
    %187 = arith.mulf %185, %186 : vector<8x1xf32>
    %188 = arith.addf %182, %187 : vector<8x1xf32>
    %189 = vector.extract_strided_slice %37 {offsets = [0, 2], sizes = [8, 1], strides = [1, 1]} : vector<8x3xf32> to vector<8x1xf32>
    %190 = vector.extract_strided_slice %37 {offsets = [0, 1], sizes = [8, 1], strides = [1, 1]} : vector<8x3xf32> to vector<8x1xf32>
    %191 = arith.mulf %189, %190 : vector<8x1xf32>
    %192 = vector.broadcast %83 : vector<1x1xf32> to vector<8x1xf32>
    %193 = arith.mulf %191, %192 : vector<8x1xf32>
    %194 = arith.addf %188, %193 : vector<8x1xf32>
    %195 = vector.extract_strided_slice %37 {offsets = [0, 2], sizes = [8, 1], strides = [1, 1]} : vector<8x3xf32> to vector<8x1xf32>
    %196 = vector.extract_strided_slice %37 {offsets = [0, 2], sizes = [8, 1], strides = [1, 1]} : vector<8x3xf32> to vector<8x1xf32>
    %197 = arith.mulf %195, %196 : vector<8x1xf32>
    %198 = vector.broadcast %90 : vector<1x1xf32> to vector<8x1xf32>
    %199 = arith.mulf %197, %198 : vector<8x1xf32>
    %200 = arith.addf %194, %199 : vector<8x1xf32>
    %cst_53 = arith.constant 9.99999974E-6 : f32
    %201 = vector.broadcast %cst_53 : f32 to vector<8x1xf32>
    %202 = arith.addf %200, %201 : vector<8x1xf32>
    %203 = math.rsqrt %202 : vector<8x1xf32>
    %204 = arith.mulf %41, %203 : vector<8x1xf32>
    %205 = vector.extract_strided_slice %36 {offsets = [0, 0], sizes = [8, 1], strides = [1, 1]} : vector<8x3xf32> to vector<8x1xf32>
    %206 = vector.extract_strided_slice %46 {offsets = [0, 0], sizes = [1, 1], strides = [1, 1]} : vector<3x1xf32> to vector<1x1xf32>
    %207 = vector.broadcast %206 : vector<1x1xf32> to vector<8x1xf32>
    %208 = arith.mulf %205, %207 : vector<8x1xf32>
    %209 = vector.extract_strided_slice %36 {offsets = [0, 1], sizes = [8, 1], strides = [1, 1]} : vector<8x3xf32> to vector<8x1xf32>
    %210 = vector.extract_strided_slice %46 {offsets = [1, 0], sizes = [1, 1], strides = [1, 1]} : vector<3x1xf32> to vector<1x1xf32>
    %211 = vector.broadcast %210 : vector<1x1xf32> to vector<8x1xf32>
    %212 = arith.mulf %209, %211 : vector<8x1xf32>
    %213 = arith.addf %208, %212 : vector<8x1xf32>
    %214 = vector.extract_strided_slice %36 {offsets = [0, 2], sizes = [8, 1], strides = [1, 1]} : vector<8x3xf32> to vector<8x1xf32>
    %215 = vector.extract_strided_slice %46 {offsets = [2, 0], sizes = [1, 1], strides = [1, 1]} : vector<3x1xf32> to vector<1x1xf32>
    %216 = vector.broadcast %215 : vector<1x1xf32> to vector<8x1xf32>
    %217 = arith.mulf %214, %216 : vector<8x1xf32>
    %218 = arith.addf %213, %217 : vector<8x1xf32>
    %219 = arith.mulf %218, %147 : vector<8x1xf32>
    %220 = arith.subf %40, %219 : vector<8x1xf32>
    %221 = vector.extract_strided_slice %37 {offsets = [0, 0], sizes = [8, 1], strides = [1, 1]} : vector<8x3xf32> to vector<8x1xf32>
    %222 = vector.extract_strided_slice %46 {offsets = [0, 0], sizes = [1, 1], strides = [1, 1]} : vector<3x1xf32> to vector<1x1xf32>
    %223 = vector.broadcast %222 : vector<1x1xf32> to vector<8x1xf32>
    %224 = arith.mulf %221, %223 : vector<8x1xf32>
    %225 = vector.extract_strided_slice %37 {offsets = [0, 1], sizes = [8, 1], strides = [1, 1]} : vector<8x3xf32> to vector<8x1xf32>
    %226 = vector.extract_strided_slice %46 {offsets = [1, 0], sizes = [1, 1], strides = [1, 1]} : vector<3x1xf32> to vector<1x1xf32>
    %227 = vector.broadcast %226 : vector<1x1xf32> to vector<8x1xf32>
    %228 = arith.mulf %225, %227 : vector<8x1xf32>
    %229 = arith.addf %224, %228 : vector<8x1xf32>
    %230 = vector.extract_strided_slice %37 {offsets = [0, 2], sizes = [8, 1], strides = [1, 1]} : vector<8x3xf32> to vector<8x1xf32>
    %231 = vector.extract_strided_slice %46 {offsets = [2, 0], sizes = [1, 1], strides = [1, 1]} : vector<3x1xf32> to vector<1x1xf32>
    %232 = vector.broadcast %231 : vector<1x1xf32> to vector<8x1xf32>
    %233 = arith.mulf %230, %232 : vector<8x1xf32>
    %234 = arith.addf %229, %233 : vector<8x1xf32>
    %235 = arith.mulf %234, %204 : vector<8x1xf32>
    %236 = arith.subf %42, %235 : vector<8x1xf32>
    %237 = vector.broadcast %147 : vector<8x1xf32> to vector<8x3xf32>
    %238 = arith.mulf %36, %237 : vector<8x3xf32>
    %239 = vector.broadcast %204 : vector<8x1xf32> to vector<8x3xf32>
    %240 = arith.mulf %37, %239 : vector<8x3xf32>
    %241 = arith.addf %240, %38 : vector<8x3xf32>
    %242 = vector.extract_strided_slice %34 {offsets = [0, 0], sizes = [1, 324], strides = [1, 1]} : vector<3x324xf32> to vector<1x324xf32>
    %243 = vector.extract_strided_slice %238 {offsets = [0, 0], sizes = [8, 1], strides = [1, 1]} : vector<8x3xf32> to vector<8x1xf32>
    %244 = vector.broadcast %243 : vector<8x1xf32> to vector<8x324xf32>
    %245 = vector.broadcast %242 : vector<1x324xf32> to vector<8x324xf32>
    %246 = arith.mulf %244, %245 : vector<8x324xf32>
    %247 = vector.extract_strided_slice %241 {offsets = [0, 0], sizes = [8, 1], strides = [1, 1]} : vector<8x3xf32> to vector<8x1xf32>
    %248 = vector.broadcast %247 : vector<8x1xf32> to vector<8x324xf32>
    %249 = vector.broadcast %242 : vector<1x324xf32> to vector<8x324xf32>
    %250 = arith.mulf %248, %249 : vector<8x324xf32>
    %251 = vector.extract_strided_slice %34 {offsets = [1, 0], sizes = [1, 324], strides = [1, 1]} : vector<3x324xf32> to vector<1x324xf32>
    %252 = vector.extract_strided_slice %238 {offsets = [0, 1], sizes = [8, 1], strides = [1, 1]} : vector<8x3xf32> to vector<8x1xf32>
    %253 = vector.broadcast %252 : vector<8x1xf32> to vector<8x324xf32>
    %254 = vector.broadcast %251 : vector<1x324xf32> to vector<8x324xf32>
    %255 = arith.mulf %253, %254 : vector<8x324xf32>
    %256 = vector.extract_strided_slice %241 {offsets = [0, 1], sizes = [8, 1], strides = [1, 1]} : vector<8x3xf32> to vector<8x1xf32>
    %257 = vector.broadcast %256 : vector<8x1xf32> to vector<8x324xf32>
    %258 = vector.broadcast %251 : vector<1x324xf32> to vector<8x324xf32>
    %259 = arith.mulf %257, %258 : vector<8x324xf32>
    %260 = arith.addf %246, %255 : vector<8x324xf32>
    %261 = arith.addf %250, %259 : vector<8x324xf32>
    %262 = vector.extract_strided_slice %34 {offsets = [2, 0], sizes = [1, 324], strides = [1, 1]} : vector<3x324xf32> to vector<1x324xf32>
    %263 = vector.extract_strided_slice %238 {offsets = [0, 2], sizes = [8, 1], strides = [1, 1]} : vector<8x3xf32> to vector<8x1xf32>
    %264 = vector.broadcast %263 : vector<8x1xf32> to vector<8x324xf32>
    %265 = vector.broadcast %262 : vector<1x324xf32> to vector<8x324xf32>
    %266 = arith.mulf %264, %265 : vector<8x324xf32>
    %267 = vector.extract_strided_slice %241 {offsets = [0, 2], sizes = [8, 1], strides = [1, 1]} : vector<8x3xf32> to vector<8x1xf32>
    %268 = vector.broadcast %267 : vector<8x1xf32> to vector<8x324xf32>
    %269 = vector.broadcast %262 : vector<1x324xf32> to vector<8x324xf32>
    %270 = arith.mulf %268, %269 : vector<8x324xf32>
    %271 = arith.addf %260, %266 : vector<8x324xf32>
    %272 = arith.addf %261, %270 : vector<8x324xf32>
    %273 = vector.broadcast %220 : vector<8x1xf32> to vector<8x324xf32>
    %274 = arith.addf %271, %273 : vector<8x324xf32>
    %cst_54 = arith.constant 0.000000e+00 : f32
    %275 = vector.broadcast %cst_54 : f32 to vector<8x324xf32>
    %276 = arith.maximumf %274, %275 : vector<8x324xf32>
    %277 = arith.addf %276, %272 : vector<8x324xf32>
    %278 = vector.broadcast %236 : vector<8x1xf32> to vector<8x324xf32>
    %279 = arith.addf %277, %278 : vector<8x324xf32>
    %c0_55 = arith.constant 0 : index
    %c0_56 = arith.constant 0 : index
    %280 = vector.load %arg2[%c0_55, %c0_56] : memref<8x324xf32, #tpu.memory_space<vmem>>, vector<8x324xf32>
    tpu.vector_store %arg2[%c0_55, %c0_56], %279 {strides = array<i32>} : memref<8x324xf32, #tpu.memory_space<vmem>>, vector<8x324xf32>,
    return
  }
}

</mosaic_0001>

<llo_original>
// kernel: model_forward.1
$region0: #{model_forward.1}
  #allocation0 [shape = 'u32[]', space=smem, size = 0x4, offset = 0x4, fixed_abs, tag = 'smem constant byte address 0x4 - core index']
  #allocation1 [shape = 'u32[144,128]{1,0:T(1,128)}', space=vmem, size = 0x12000, scoped, tag = 'internal scratch']
  #allocation2 [shape = 'f32[3,324]{1,0:T(4,128)}', space=vmem, size = 0x1800, scoped, tag = 'scratch operand']
  %s0 = inlined_call_operand.vmem [shape: f32[3,256], index: 0, kind: input, shape index: {}]
  %s1 = inlined_call_operand.vmem [shape: f32[8,13], index: 1, kind: input, shape index: {}]
  %s2 = inlined_call_operand.vmem [shape: f32[8,324], index: 2, kind: output, shape index: {}]
  %s3 = sld [smem:[#allocation0]]
  $region18: #{model_forward.1} parent=0
    _
  %s5 = ssub.s32 1, %s3
  %s6 = scalar_select 0, %s5, %s3
  // Predicated region
  $region2: #{model_forward.1} parent=0 // pred_check
    _
  $region3: #{model_forward.1} parent=0 // pred_check_branch
    %8 = sbr.rel (0) target = $region5
  $region4: #{model_forward.1} parent=0 // pred_region
    _
  $region5: #{model_forward.1} parent=0 // pred_fallthru
    _
  // Predicated region
  $region6: #{model_forward.1} parent=0 // pred_check
    _
  $region7: #{model_forward.1} parent=0 // pred_check_branch
    %10 = sbr.rel (0) target = $region9
  $region8: #{model_forward.1} parent=0 // pred_region
    _
  $region9: #{model_forward.1} parent=0 // pred_fallthru
    _
  %11 = vst [vmem:[#allocation2] sm:$0x77] 0.0
  %vm12 = vcmask 550912
  %13 = vst.msk [vmem:[#allocation2 + $0x8] sm:$0x7] %vm12, 0.0
  %v14 = vld [vmem:[%s0] sm:$0x7]
  %16 = vrot.lane.b32.xlu0 %v14, 19
  %v17 = vpop.permute.xlu0 %16
  %vm19 = vcmask 280728
  %20 = vst.msk [vmem:[#allocation2] sm:$0x7] %vm19, %v17
  %v21 = vld [vmem:[%s0] sm:$0x7]
  %23 = vrot.lane.b32.xlu0 %v21, 21
  %v24 = vpop.permute.xlu0 %23
  %vm26 = vcmask 428328
  %27 = vst.msk [vmem:[#allocation2] sm:$0x7] %vm26, %v24
  %v28 = vld [vmem:[%s0] sm:$0x7]
  %30 = vrot.lane.b32.xlu0 %v28, 23
  %v31 = vpop.permute.xlu0 %30
  %vm33 = vcmask 575928
  %34 = vst.msk [vmem:[#allocation2] sm:$0x7] %vm33, %v31
  %v35 = vld [vmem:[%s0] sm:$0x7]
  %37 = vrot.lane.b32.xlu0 %v35, 25
  %v38 = vpop.permute.xlu0 %37
  %vm40 = vcmask 723528
  %41 = vst.msk [vmem:[#allocation2] sm:$0x7] %vm40, %v38
  %v42 = vld [vmem:[%s0] sm:$0x7]
  %44 = vrot.lane.b32.xlu0 %v42, 27
  %v45 = vpop.permute.xlu0 %44
  %vm47 = vcmask 871128
  %48 = vst.msk [vmem:[#allocation2] sm:$0x7] %vm47, %v45
  %v49 = vld [vmem:[%s0] sm:$0x7]
  %51 = vrot.lane.b32.xlu0 %v49, 29
  %v52 = vpop.permute.xlu0 %51
  %vm54 = vcmask 1018728
  %55 = vst.msk [vmem:[#allocation2] sm:$0x7] %vm54, %v52
  %v56 = vld [vmem:[%s0] sm:$0x7]
  %58 = vrot.lane.b32.xlu0 %v56, 31
  %v59 = vpop.permute.xlu0 %58
  %v60 = vrot.slane %v59, 4
  %vm61 = vcmask 252928
  %v62 = vsel %vm61, %v60, %v59
  %vm64 = vcmask 1043448
  %vm65 = vcmask 120836
  %vm66 = vmor %vm65, %vm64
  %67 = vst.msk [vmem:[#allocation2] sm:$0x77] %vm66, %v62
  %v68 = vld [vmem:[%s0] sm:$0x7]
  %70 = vrot.lane.b32.xlu0 %v68, 33
  %v71 = vpop.permute.xlu0 %70
  %vm73 = vcmask 264328
  %74 = vst.msk [vmem:[#allocation2 + $0x4] sm:$0x7] %vm73, %v71
  %v75 = vld [vmem:[%s0 + $0x4] sm:$0x7]
  %77 = vrot.lane.b32.xlu0 %v75, 35
  %v78 = vpop.permute.xlu0 %77
  %vm80 = vcmask 411928
  %81 = vst.msk [vmem:[#allocation2 + $0x4] sm:$0x7] %vm80, %v78
  %v82 = vld [vmem:[%s0 + $0x4] sm:$0x7]
  %84 = vrot.lane.b32.xlu0 %v82, 37
  %v85 = vpop.permute.xlu0 %84
  %vm87 = vcmask 559528
  %88 = vst.msk [vmem:[#allocation2 + $0x4] sm:$0x7] %vm87, %v85
  %v89 = vld [vmem:[%s0 + $0x4] sm:$0x7]
  %91 = vrot.lane.b32.xlu0 %v89, 39
  %v92 = vpop.permute.xlu0 %91
  %vm94 = vcmask 707128
  %95 = vst.msk [vmem:[#allocation2 + $0x4] sm:$0x7] %vm94, %v92
  %v96 = vld [vmem:[%s0 + $0x4] sm:$0x7]
  %98 = vrot.lane.b32.xlu0 %v96, 41
  %v99 = vpop.permute.xlu0 %98
  %vm101 = vcmask 854728
  %102 = vst.msk [vmem:[#allocation2 + $0x4] sm:$0x7] %vm101, %v99
  %v103 = vld [vmem:[%s0 + $0x4] sm:$0x7]
  %105 = vrot.lane.b32.xlu0 %v103, 43
  %v106 = vpop.permute.xlu0 %105
  %vm108 = vcmask 1002328
  %109 = vst.msk [vmem:[#allocation2 + $0x4] sm:$0x7] %vm108, %v106
  %v110 = vld [vmem:[%s0 + $0x4] sm:$0x7]
  %112 = vrot.lane.b32.xlu0 %v110, 45
  %v113 = vpop.permute.xlu0 %112
  %v114 = vrot.slane %v113, 4
  %vm115 = vcmask 367616
  %v116 = vsel %vm115, %v114, %v113
  %vm118 = vcmask 1043432
  %vm119 = vcmask 104452
  %vm120 = vmor %vm119, %vm118
  %121 = vst.msk [vmem:[#allocation2 + $0x4] sm:$0x77] %vm120, %v116
  %v122 = vld [vmem:[%s0 + $0x4] sm:$0x7]
  %124 = vrot.lane.b32.xlu0 %v122, 47
  %v125 = vpop.permute.xlu0 %124
  %vm127 = vcmask 247928
  %128 = vst.msk [vmem:[#allocation2 + $0x8] sm:$0x7] %vm127, %v125
  %v129 = vld [vmem:[%s0 + $0x4] sm:$0x7]
  %131 = vrot.lane.b32.xlu0 %v129, 49
  %v132 = vpop.permute.xlu0 %131
  %vm134 = vcmask 395528
  %135 = vst.msk [vmem:[#allocation2 + $0x8] sm:$0x7] %vm134, %v132
  %v136 = vld [vmem:[#allocation2] sm:$0x77]
  %v137 = vld [vmem:[#allocation2 + $0x8] sm:$0x7]
  %v138 = vld [vmem:[%s1] sm:$0xff]
  %v141 = vcombine.high %v136, %v136
  %vm143 = vcmask 1042432
  %v144 = vsel %vm143, %v136, 0.0
  %v145 = vsel %vm143, %v141, 0.0
  %v146 = vadd.f32 %v144, %v145
  %v147 = vsel %vm12, %v137, 0.0
  %v148 = vadd.f32 %v146, %v147
  %149 = vadd.xlane.f32.xlu0 %v148
  %v150 = vpop.xlane.xlu0 %149
  %v151 = vmul.f32 %v150, 0.0030864198
  %v154 = vunpack.c.l.s4 839922192
  %v155 = vunpack.c.0.s8 %v154
  %v156 = vlaneseq
  %v157 = vshrl.u32 %v156, 7
  %v158 = vsub.s32 %v155, %v157
  %v159 = vrot.slane %v151, %v158
  %v161 = vsub.f32 %v136, %v159
  %v162 = vsub.f32 %v137, %v159
  %v163 = vmul.f32 %v161, %v161
  %v164 = vmul.f32 %v162, %v162
  %v167 = vlaneseq
  %v168 = vshrl.u32 %v167, 7
  %v169 = vsub.s32 0, %v168
  %v170 = vrot.slane %v163, %v169
  %v171 = vlaneseq
  %v172 = vshrl.u32 %v171, 7
  %v173 = vsub.s32 4, %v172
  %v174 = vrot.slane %v163, %v173
  %v175 = vlaneseq
  %v176 = vshrl.u32 %v175, 7
  %v177 = vsub.s32 0, %v176
  %v178 = vrot.slane %v164, %v177
  %vm182 = vcmask 1040384
  %v183 = vsel %vm182, %v170, 0.0
  %v184 = vsel %vm182, %v174, 0.0
  %v185 = vadd.f32 %v183, %v184
  %vm186 = vcmask 548864
  %v187 = vsel %vm186, %v178, 0.0
  %v188 = vadd.f32 %v185, %v187
  %189 = vadd.xlane.f32.xlu0 %v188
  %v190 = vpop.xlane.xlu0 %189
  %v191 = vmul.f32 %v190, 0.0030864198
  %v194 = vrot.slane %v161, 5
  %v195 = vrot.slane %v194, 4
  %v196 = vrot.slane %v162, 5
  %v197 = vrot.slane %v196, 4
  %v200 = vmul.f32 %v161, %v195
  %v201 = vmul.f32 %v162, %v197
  %v204 = vlaneseq
  %v205 = vshrl.u32 %v204, 7
  %v206 = vsub.s32 0, %v205
  %v207 = vrot.slane %v200, %v206
  %v208 = vlaneseq
  %v209 = vshrl.u32 %v208, 7
  %v210 = vsub.s32 4, %v209
  %v211 = vrot.slane %v200, %v210
  %v212 = vlaneseq
  %v213 = vshrl.u32 %v212, 7
  %v214 = vsub.s32 0, %v213
  %v215 = vrot.slane %v201, %v214
  %v219 = vsel %vm182, %v207, 0.0
  %v220 = vsel %vm182, %v211, 0.0
  %v221 = vadd.f32 %v219, %v220
  %v222 = vsel %vm186, %v215, 0.0
  %v223 = vadd.f32 %v221, %v222
  %224 = vadd.xlane.f32.xlu0 %v223
  %v225 = vpop.xlane.xlu0 %224
  %v226 = vmul.f32 %v225, 0.0030864198
  %v227 = vrot.slane %v161, 6
  %v228 = vrot.slane %v227, 4
  %v229 = vrot.slane %v162, 6
  %v230 = vrot.slane %v229, 4
  %v233 = vmul.f32 %v161, %v228
  %v234 = vmul.f32 %v162, %v230
  %v237 = vlaneseq
  %v238 = vshrl.u32 %v237, 7
  %v239 = vsub.s32 0, %v238
  %v240 = vrot.slane %v233, %v239
  %v241 = vlaneseq
  %v242 = vshrl.u32 %v241, 7
  %v243 = vsub.s32 4, %v242
  %v244 = vrot.slane %v233, %v243
  %v245 = vlaneseq
  %v246 = vshrl.u32 %v245, 7
  %v247 = vsub.s32 0, %v246
  %v248 = vrot.slane %v234, %v247
  %v252 = vsel %vm182, %v240, 0.0
  %v253 = vsel %vm182, %v244, 0.0
  %v254 = vadd.f32 %v252, %v253
  %v255 = vsel %vm186, %v248, 0.0
  %v256 = vadd.f32 %v254, %v255
  %257 = vadd.xlane.f32.xlu0 %v256
  %v258 = vpop.xlane.xlu0 %257
  %v259 = vmul.f32 %v258, 0.0030864198
  %v260 = vlaneseq
  %v261 = vshrl.u32 %v260, 7
  %v262 = vsub.s32 1, %v261
  %v263 = vrot.slane %v163, %v262
  %v264 = vlaneseq
  %v265 = vshrl.u32 %v264, 7
  %v266 = vsub.s32 5, %v265
  %v267 = vrot.slane %v163, %v266
  %v268 = vlaneseq
  %v269 = vshrl.u32 %v268, 7
  %v270 = vsub.s32 1, %v269
  %v271 = vrot.slane %v164, %v270
  %vm275 = vcmask 1041409
  %v276 = vsel %vm275, %v263, 0.0
  %v277 = vsel %vm275, %v267, 0.0
  %v278 = vadd.f32 %v276, %v277
  %vm279 = vcmask 549889
  %v280 = vsel %vm279, %v271, 0.0
  %v281 = vadd.f32 %v278, %v280
  %282 = vadd.xlane.f32.xlu0 %v281
  %v283 = vpop.xlane.xlu0 %282
  %v284 = vmul.f32 %v283, 0.0030864198
  %v285 = vlaneseq
  %v286 = vshrl.u32 %v285, 7
  %v287 = vsub.s32 1, %v286
  %v288 = vrot.slane %v200, %v287
  %v289 = vlaneseq
  %v290 = vshrl.u32 %v289, 7
  %v291 = vsub.s32 5, %v290
  %v292 = vrot.slane %v200, %v291
  %v293 = vlaneseq
  %v294 = vshrl.u32 %v293, 7
  %v295 = vsub.s32 1, %v294
  %v296 = vrot.slane %v201, %v295
  %v300 = vsel %vm275, %v288, 0.0
  %v301 = vsel %vm275, %v292, 0.0
  %v302 = vadd.f32 %v300, %v301
  %v303 = vsel %vm279, %v296, 0.0
  %v304 = vadd.f32 %v302, %v303
  %305 = vadd.xlane.f32.xlu0 %v304
  %v306 = vpop.xlane.xlu0 %305
  %v307 = vmul.f32 %v306, 0.0030864198
  %v308 = vlaneseq
  %v309 = vshrl.u32 %v308, 7
  %v310 = vsub.s32 2, %v309
  %v311 = vrot.slane %v163, %v310
  %v312 = vlaneseq
  %v313 = vshrl.u32 %v312, 7
  %v314 = vsub.s32 6, %v313
  %v315 = vrot.slane %v163, %v314
  %v316 = vlaneseq
  %v317 = vshrl.u32 %v316, 7
  %v318 = vsub.s32 2, %v317
  %v319 = vrot.slane %v164, %v318
  %vm323 = vcmask 1042434
  %v324 = vsel %vm323, %v311, 0.0
  %v325 = vsel %vm323, %v315, 0.0
  %v326 = vadd.f32 %v324, %v325
  %vm327 = vcmask 550914
  %v328 = vsel %vm327, %v319, 0.0
  %v329 = vadd.f32 %v326, %v328
  %330 = vadd.xlane.f32.xlu0 %v329
  %v331 = vpop.xlane.xlu0 %330
  %v332 = vmul.f32 %v331, 0.0030864198
  %v333 = vmul.f32 %v138, %v138
  %v334 = vlaneseq
  %v335 = vshrl.u32 %v334, 7
  %v336 = vsub.s32 0, %v335
  %v337 = vrot.slane %v191, %v336
  %v338 = vmul.f32 %v333, %v337
  %340 = vrot.lane.b32.xlu0 %v138, 127
  %v341 = vpop.permute.xlu0 %340
  %v343 = vmul.f32 %v138, %v341
  %v344 = vlaneseq
  %v345 = vshrl.u32 %v344, 7
  %v346 = vsub.s32 0, %v345
  %v347 = vrot.slane %v226, %v346
  %v348 = vmul.f32 %v343, %v347
  %v349 = vadd.f32 %v338, %v348
  %350 = vrot.lane.b32.xlu0 %v138, 126
  %v351 = vpop.permute.xlu0 %350
  %v353 = vmul.f32 %v138, %v351
  %v354 = vlaneseq
  %v355 = vshrl.u32 %v354, 7
  %v356 = vsub.s32 0, %v355
  %v357 = vrot.slane %v259, %v356
  %v358 = vmul.f32 %v353, %v357
  %v359 = vadd.f32 %v349, %v358
  %v360 = vadd.f32 %v359, %v348
  %v361 = vlaneseq
  %v362 = vshrl.u32 %v361, 7
  %v363 = vsub.s32 1, %v362
  %v364 = vrot.slane %v284, %v363
  %v365 = vmul.f32 %v333, %v364
  %367 = vrot.lane.b32.xlu0 %v365, 127
  %v368 = vpop.permute.xlu0 %367
  %v370 = vadd.f32 %v360, %v368
  %v371 = vlaneseq
  %v372 = vshrl.u32 %v371, 7
  %v373 = vsub.s32 1, %v372
  %v374 = vrot.slane %v307, %v373
  %v375 = vmul.f32 %v343, %v374
  %377 = vrot.lane.b32.xlu0 %v375, 127
  %v378 = vpop.permute.xlu0 %377
  %v380 = vadd.f32 %v370, %v378
  %v381 = vadd.f32 %v380, %v358
  %v382 = vadd.f32 %v381, %v378
  %v383 = vlaneseq
  %v384 = vshrl.u32 %v383, 7
  %v385 = vsub.s32 2, %v384
  %v386 = vrot.slane %v332, %v385
  %v387 = vmul.f32 %v333, %v386
  %389 = vrot.lane.b32.xlu0 %v387, 126
  %v390 = vpop.permute.xlu0 %389
  %v392 = vadd.f32 %v382, %v390
  %v393 = vadd.f32 %v392, 1e-05
  %v394 = vrsqrt.pop %v393
  %396 = vrot.lane.b32.xlu0 %v394, 9
  %v397 = vpop.permute.xlu0 %396
  %v399 = vmul.f32 %v138, %v397
  %400 = vrot.lane.b32.xlu0 %v394, 8
  %v401 = vpop.permute.xlu0 %400
  %v403 = vmul.f32 %v138, %v401
  %v404 = vlaneseq
  %v405 = vshrl.u32 %v404, 7
  %v406 = vsub.s32 0, %v405
  %v407 = vrot.slane %v151, %v406
  %v408 = vmul.f32 %v138, %v407
  %v409 = vlaneseq
  %v410 = vshrl.u32 %v409, 7
  %v411 = vsub.s32 1, %v410
  %v412 = vrot.slane %v151, %v411
  %v413 = vmul.f32 %v138, %v412
  %415 = vrot.lane.b32.xlu0 %v413, 127
  %v416 = vpop.permute.xlu0 %415
  %v418 = vadd.f32 %v408, %v416
  %v419 = vlaneseq
  %v420 = vshrl.u32 %v419, 7
  %v421 = vsub.s32 2, %v420
  %v422 = vrot.slane %v151, %v421
  %v423 = vmul.f32 %v138, %v422
  %425 = vrot.lane.b32.xlu0 %v423, 126
  %v426 = vpop.permute.xlu0 %425
  %v428 = vadd.f32 %v418, %v426
  %430 = vrot.lane.b32.xlu0 %v399, 119
  %v431 = vpop.permute.xlu0 %430
  %v433 = vmul.f32 %v428, %v431
  %435 = vrot.lane.b32.xlu0 %v433, 10
  %v436 = vpop.permute.xlu0 %435
  %v438 = vsub.f32 %v138, %v436
  %440 = vrot.lane.b32.xlu0 %v403, 120
  %v441 = vpop.permute.xlu0 %440
  %v443 = vmul.f32 %v428, %v441
  %445 = vrot.lane.b32.xlu0 %v443, 9
  %v446 = vpop.permute.xlu0 %445
  %v448 = vsub.f32 %v138, %v446
  %449 = vset.pattern.permute.xlu0 9
  %450 = vperm.xlu0 %449, %v399
  %v451 = vpop.permute.xlu0 %450
  %v453 = vmul.f32 %v138, %v451
  %454 = vset.pattern.permute.xlu0 11
  %455 = vperm.xlu0 %454, %v403
  %v456 = vpop.permute.xlu0 %455
  %v458 = vmul.f32 %v138, %v456
  %459 = vrot.lane.b32.xlu0 %v138, 125
  %v460 = vpop.permute.xlu0 %459
  %v462 = vadd.f32 %v458, %v460
  %464 = vset.pattern.permute.xlu0 0
  %465 = vperm.xlu0 %464, %v453
  %v466 = vpop.permute.xlu0 %465
  %v468 = vlaneseq
  %v469 = vshrl.u32 %v468, 7
  %v470 = vsub.s32 0, %v469
  %v471 = vrot.slane %v136, %v470
  %v472 = vlaneseq
  %v473 = vshrl.u32 %v472, 7
  %v474 = vsub.s32 4, %v473
  %v475 = vrot.slane %v136, %v474
  %v476 = vlaneseq
  %v477 = vshrl.u32 %v476, 7
  %v478 = vsub.s32 0, %v477
  %v479 = vrot.slane %v137, %v478
  %v483 = vlaneseq
  %v484 = vshrl.u32 %v483, 7
  %v485 = vsub.s32 0, %v484
  %v486 = vrot.slane %v471, %v485
  %v487 = vlaneseq
  %v488 = vshrl.u32 %v487, 7
  %v489 = vsub.s32 0, %v488
  %v490 = vrot.slane %v475, %v489
  %v491 = vlaneseq
  %v492 = vshrl.u32 %v491, 7
  %v493 = vsub.s32 0, %v492
  %v494 = vrot.slane %v479, %v493
  %v495 = vmul.f32 %v466, %v486
  %v496 = vmul.f32 %v466, %v490
  %v497 = vmul.f32 %v466, %v494
  %499 = vset.pattern.permute.xlu0 3
  %500 = vperm.xlu0 %499, %v462
  %v501 = vpop.permute.xlu0 %500
  %v503 = vmul.f32 %v501, %v486
  %v504 = vmul.f32 %v501, %v490
  %v505 = vmul.f32 %v501, %v494
  %506 = vset.pattern.permute.xlu0 1
  %507 = vperm.xlu0 %506, %v453
  %v508 = vpop.permute.xlu0 %507
  %v510 = vlaneseq
  %v511 = vshrl.u32 %v510, 7
  %v512 = vsub.s32 1, %v511
  %v513 = vrot.slane %v136, %v512
  %v514 = vlaneseq
  %v515 = vshrl.u32 %v514, 7
  %v516 = vsub.s32 5, %v515
  %v517 = vrot.slane %v136, %v516
  %v518 = vlaneseq
  %v519 = vshrl.u32 %v518, 7
  %v520 = vsub.s32 1, %v519
  %v521 = vrot.slane %v137, %v520
  %v525 = vlaneseq
  %v526 = vshrl.u32 %v525, 7
  %v527 = vsub.s32 1, %v526
  %v528 = vrot.slane %v513, %v527
  %v529 = vlaneseq
  %v530 = vshrl.u32 %v529, 7
  %v531 = vsub.s32 1, %v530
  %v532 = vrot.slane %v517, %v531
  %v533 = vlaneseq
  %v534 = vshrl.u32 %v533, 7
  %v535 = vsub.s32 1, %v534
  %v536 = vrot.slane %v521, %v535
  %v537 = vmul.f32 %v508, %v528
  %v538 = vmul.f32 %v508, %v532
  %v539 = vmul.f32 %v508, %v536
  %540 = vset.pattern.permute.xlu0 4
  %541 = vperm.xlu0 %540, %v462
  %v542 = vpop.permute.xlu0 %541
  %v544 = vmul.f32 %v542, %v528
  %v545 = vmul.f32 %v542, %v532
  %v546 = vmul.f32 %v542, %v536
  %v547 = vadd.f32 %v495, %v537
  %v548 = vadd.f32 %v496, %v538
  %v549 = vadd.f32 %v497, %v539
  %v550 = vadd.f32 %v503, %v544
  %v551 = vadd.f32 %v504, %v545
  %v552 = vadd.f32 %v505, %v546
  %553 = vset.pattern.permute.xlu0 2
  %554 = vperm.xlu0 %553, %v453
  %v555 = vpop.permute.xlu0 %554
  %v557 = vlaneseq
  %v558 = vshrl.u32 %v557, 7
  %v559 = vsub.s32 2, %v558
  %v560 = vrot.slane %v136, %v559
  %v561 = vlaneseq
  %v562 = vshrl.u32 %v561, 7
  %v563 = vsub.s32 6, %v562
  %v564 = vrot.slane %v136, %v563
  %v565 = vlaneseq
  %v566 = vshrl.u32 %v565, 7
  %v567 = vsub.s32 2, %v566
  %v568 = vrot.slane %v137, %v567
  %v572 = vlaneseq
  %v573 = vshrl.u32 %v572, 7
  %v574 = vsub.s32 2, %v573
  %v575 = vrot.slane %v560, %v574
  %v576 = vlaneseq
  %v577 = vshrl.u32 %v576, 7
  %v578 = vsub.s32 2, %v577
  %v579 = vrot.slane %v564, %v578
  %v580 = vlaneseq
  %v581 = vshrl.u32 %v580, 7
  %v582 = vsub.s32 2, %v581
  %v583 = vrot.slane %v568, %v582
  %v584 = vmul.f32 %v555, %v575
  %v585 = vmul.f32 %v555, %v579
  %v586 = vmul.f32 %v555, %v583
  %587 = vset.pattern.permute.xlu0 5
  %588 = vperm.xlu0 %587, %v462
  %v589 = vpop.permute.xlu0 %588
  %v591 = vmul.f32 %v589, %v575
  %v592 = vmul.f32 %v589, %v579
  %v593 = vmul.f32 %v589, %v583
  %v594 = vadd.f32 %v547, %v584
  %v595 = vadd.f32 %v548, %v585
  %v596 = vadd.f32 %v549, %v586
  %v597 = vadd.f32 %v550, %v591
  %v598 = vadd.f32 %v551, %v592
  %v599 = vadd.f32 %v552, %v593
  %601 = vset.pattern.permute.xlu0 10
  %602 = vperm.xlu0 %601, %v438
  %v603 = vpop.permute.xlu0 %602
  %v605 = vadd.f32 %v594, %v603
  %v606 = vadd.f32 %v595, %v603
  %v607 = vadd.f32 %v596, %v603
  %v608 = vmax.f32 %v605, 0.0
  %v609 = vmax.f32 %v606, 0.0
  %v610 = vmax.f32 %v607, 0.0
  %v611 = vadd.f32 %v608, %v597
  %v612 = vadd.f32 %v609, %v598
  %v613 = vadd.f32 %v610, %v599
  %615 = vset.pattern.permute.xlu0 12
  %616 = vperm.xlu0 %615, %v448
  %v617 = vpop.permute.xlu0 %616
  %v619 = vadd.f32 %v611, %v617
  %v620 = vadd.f32 %v612, %v617
  %v621 = vadd.f32 %v613, %v617
  %622 = vst [vmem:[%s2] sm:$0xff] %v619
  %623 = vst [vmem:[%s2 + $0x8] sm:$0xff] %v620
  %vm624 = vcmask 556032
  %625 = vst.msk [vmem:[%s2 + $0x10] sm:$0xff] %vm624, %v621
  // Predicated region
  $region10: #{model_forward.1} parent=0 // pred_check
    _
  $region11: #{model_forward.1} parent=0 // pred_check_branch
    %627 = sbr.rel (0) target = $region13
  $region12: #{model_forward.1} parent=0 // pred_region
    _
  $region13: #{model_forward.1} parent=0 // pred_fallthru
    _
  // Predicated region
  $region14: #{model_forward.1} parent=0 // pred_check
    _
  $region15: #{model_forward.1} parent=0 // pred_check_branch
    %629 = sbr.rel (0) target = $region17
  $region16: #{model_forward.1} parent=0 // pred_region
    _
  $region17: #{model_forward.1} parent=0 // pred_fallthru
    _

</llo_original>
